<compile_context>
chip_gen: v7x
topology: tpu7x:2x2x1
jax: 0.10.0
libtpu: 0.0.40
codegen_flags: <defaults>
</compile_context>

<pallas_src>
import functools
import math

import jax
import jax.numpy as jnp
from jax import lax
from jax.experimental import pallas as pl
from jax.experimental.pallas import tpu as pltpu


def build_pe_table(d_model: int, max_len: int) -> jnp.ndarray:
    """Deterministic sinusoidal positional-encoding table [max_len, d_model] (setup glue)."""
    position = jnp.arange(max_len, dtype=jnp.float32)[:, None]            # [L, 1]
    div_term = jnp.exp(
        jnp.arange(0, d_model, 2, dtype=jnp.float32) * (-math.log(10000.0) / d_model)
    )                                                                     # [D/2]
    pe = jnp.zeros((max_len, d_model), dtype=jnp.float32)
    pe = pe.at[:, 0::2].set(jnp.sin(position * div_term))
    pe = pe.at[:, 1::2].set(jnp.cos(position * div_term))
    return pe


def _pe_dropout_kernel(seed_ref, x_ref, pe_ref, o_ref, *,
                       dropout_prob: float, training: bool, block_rows: int):
    # Blocks: x_ref / pe_ref / o_ref are (block_rows, B*D) — lane-dense last dim.
    y = x_ref[...].astype(jnp.float32) + pe_ref[...].astype(jnp.float32)

    if training and dropout_prob >= 1.0:
        y = jnp.zeros_like(y)
    elif training and dropout_prob > 0.0:
        # Stateless counter-based PRNG: hash(global_row, col, seed) -> 24-bit
        # uniform, keep iff value >= round(p * 2^24). Pure VPU integer ops
        # (mul/xor/shift wrap mod 2^32); no stateful TPU PRNG needed.
        shape = y.shape
        row0 = pl.program_id(0) * block_rows
        rows = (lax.broadcasted_iota(jnp.int32, shape, 0) + row0).astype(jnp.uint32)
        cols = lax.broadcasted_iota(jnp.int32, shape, 1).astype(jnp.uint32)
        seed_u = seed_ref[0].astype(jnp.uint32) * jnp.uint32(0x27D4EB2F)

        h = rows * jnp.uint32(0x9E3779B1) + cols * jnp.uint32(0x85EBCA77)
        h = h ^ seed_u
        # murmur3-style finalizer for diffusion
        h = h ^ (h >> 16)
        h = h * jnp.uint32(0x7FEB352D)
        h = h ^ (h >> 15)
        h = h * jnp.uint32(0x846CA68B)
        h = h ^ (h >> 16)

        h24 = (h >> 8).astype(jnp.int32)                      # uniform in [0, 2^24)
        thresh = jnp.int32(int(round(dropout_prob * float(1 << 24))))
        keep = h24 >= thresh                                  # P(keep) = 1 - p
        scale = jnp.float32(1.0 / (1.0 - dropout_prob))
        y = jnp.where(keep, y * scale, jnp.float32(0.0))

    o_ref[...] = y


def _pick_block_rows(num_rows: int, row_bytes: int, target_bytes: int = 4 << 20) -> int:
    """Largest seq tile with ~target_bytes per buffer: 3 streams x 2 pipeline
    buffers x 4 MiB ~= 24 MiB, inside the default scoped-VMEM limit everywhere."""
    ts = max(1, target_bytes // max(row_bytes, 1))
    if ts >= num_rows:
        return num_rows
    ts = max(8, (ts // 8) * 8)        # non-full second-to-last block dim must be a multiple of 8
    return min(ts, num_rows)


def positional_encoding_forward(
    x: jnp.ndarray,
    pe_table: jnp.ndarray,
    *,
    dropout_prob: float = 0.1,
    training: bool = False,
    seed: int = 0,
) -> jnp.ndarray:
    """x: [seq_len, batch, d_model] -> float32 [seq_len, batch, d_model]."""
    S, B, D = x.shape
    BD = B * D

    # Lane-dense 2-D views. The reshape is a free contiguous view; the PE tile
    # along lanes is one-time parameter glue (analogous to the registered buffer).
    x2d = x.reshape(S, BD)
    pe2d = jnp.tile(pe_table[:S, :].astype(jnp.float32), (1, B))          # [S, B*D]
    seed_arr = jnp.asarray([seed], dtype=jnp.int32)

    ts = _pick_block_rows(S, BD * 4)
    grid = (pl.cdiv(S, ts),)

    kernel = functools.partial(
        _pe_dropout_kernel,
        dropout_prob=float(dropout_prob),
        training=bool(training),
        block_rows=ts,
    )

    out2d = pl.pallas_call(
        kernel,
        out_shape=jax.ShapeDtypeStruct((S, BD), jnp.float32),
        grid_spec=pltpu.PrefetchScalarGridSpec(
            num_scalar_prefetch=1,                                        # seed lands in SMEM
            grid=grid,
            in_specs=[
                pl.BlockSpec((ts, BD), lambda i, seed: (i, 0)),           # x slab tile
                pl.BlockSpec((ts, BD), lambda i, seed: (i, 0)),           # matching PE tile
            ],
            out_specs=pl.BlockSpec((ts, BD), lambda i, seed: (i, 0)),
        ),
        compiler_params=pltpu.CompilerParams(
            dimension_semantics=("parallel",),                            # grid steps independent
        ),
        cost_estimate=pl.CostEstimate(
            flops=S * BD,
            transcendentals=0,
            bytes_accessed=3 * S * BD * 4,
        ),
    )(seed_arr, x2d, pe2d)

    return out2d.reshape(S, B, D)


if __name__ == "__main__":
    # Small shapes consistent with the module's [seq_len, batch, d_model] input.
    seq_len, batch, d_model, max_len = 8, 4, 32, 64
    dropout_prob = 0.1

    key = jax.random.PRNGKey(0)
    x = jax.random.normal(key, (seq_len, batch, d_model), dtype=jnp.float32)
    pe_table = build_pe_table(d_model, max_len)

    ref = x.astype(jnp.float32) + pe_table[:seq_len][:, None, :]

    # Eval mode: dropout is identity -> exact match with pure-JAX reference.
    out_eval = positional_encoding_forward(
        x, pe_table, dropout_prob=dropout_prob, training=False
    )
    jax.block_until_ready(out_eval)
    assert out_eval.shape == (seq_len, batch, d_model)
    assert out_eval.dtype == jnp.float32
    assert jnp.allclose(out_eval, ref, atol=1e-6, rtol=1e-6)

    # Training mode, p=0: dropout is still identity.
    out_p0 = positional_encoding_forward(x, pe_table, dropout_prob=0.0, training=True)
    jax.block_until_ready(out_p0)
    assert jnp.allclose(out_p0, ref, atol=1e-6, rtol=1e-6)

    # Training mode: inverted dropout. Each element is either dropped (0) or
    # scaled by 1/(1-p).
    out_train = positional_encoding_forward(
        x, pe_table, dropout_prob=dropout_prob, training=True, seed=123
    )
    jax.block_until_ready(out_train)
    assert out_train.shape == (seq_len, batch, d_model)
    scaled = ref / (1.0 - dropout_prob)
    ok = jnp.isclose(out_train, 0.0) | jnp.isclose(out_train, scaled, atol=1e-5, rtol=1e-5)
    assert bool(jnp.all(ok))

    print("KERNEL_OK")
</pallas_src>

<mosaic_0001>
module attributes {stable_mosaic.version = 11 : i64} {
  func.func @_pe_dropout_kernel(%arg0: i32, %arg1: memref<1xi32, #tpu.memory_space<smem>>, %arg2: memref<8x128xf32, #tpu.memory_space<vmem>>, %arg3: memref<8x128xf32, #tpu.memory_space<vmem>>, %arg4: memref<8x128xf32, #tpu.memory_space<vmem>>) attributes {dimension_semantics = [#tpu.dimension_semantics<parallel>], iteration_bounds = array<i64: 1>, scalar_prefetch = 1 : i64, scratch_operands = 0 : i64, tpu.core_type = #tpu.core_type<tc>, window_params = [{transform_indices = @transform_0, window_bounds = array<i64: 8, 128>}, {transform_indices = @transform_1, window_bounds = array<i64: 8, 128>}, {transform_indices = @transform_2, window_bounds = array<i64: 8, 128>}]} {
    %c0 = arith.constant 0 : index
    %c0_0 = arith.constant 0 : index
    %0 = vector.load %arg2[%c0, %c0_0] : memref<8x128xf32, #tpu.memory_space<vmem>>, vector<8x128xf32>
    %c0_1 = arith.constant 0 : index
    %c0_2 = arith.constant 0 : index
    %1 = vector.load %arg3[%c0_1, %c0_2] : memref<8x128xf32, #tpu.memory_space<vmem>>, vector<8x128xf32>
    %2 = arith.addf %0, %1 : vector<8x128xf32>
    %c0_3 = arith.constant 0 : index
    %c0_4 = arith.constant 0 : index
    %3 = vector.load %arg4[%c0_3, %c0_4] : memref<8x128xf32, #tpu.memory_space<vmem>>, vector<8x128xf32>
    tpu.vector_store %arg4[%c0_3, %c0_4], %2 {strides = array<i32>} : memref<8x128xf32, #tpu.memory_space<vmem>>, vector<8x128xf32>,
    return
  }
  func.func @transform_0(%arg0: i32, %arg1: memref<1xi32, #tpu.memory_space<smem>>) -> (i32, i32) {
    %c0_i32 = arith.constant 0 : i32
    %c0_i32_0 = arith.constant 0 : i32
    return %arg0, %c0_i32 : i32, i32
  }
  func.func @transform_1(%arg0: i32, %arg1: memref<1xi32, #tpu.memory_space<smem>>) -> (i32, i32) {
    %c0_i32 = arith.constant 0 : i32
    %c0_i32_0 = arith.constant 0 : i32
    return %arg0, %c0_i32 : i32, i32
  }
  func.func @transform_2(%arg0: i32, %arg1: memref<1xi32, #tpu.memory_space<smem>>) -> (i32, i32) {
    %c0_i32 = arith.constant 0 : i32
    %c0_i32_0 = arith.constant 0 : i32
    return %arg0, %c0_i32 : i32, i32
  }
}

</mosaic_0001>

<llo_original>
// kernel: tpu_custom_call.1
$region0: #{tpu_custom_call.1}
  #allocation0 [shape = 'u32[]', space=smem, size = 0x4, offset = 0x4, fixed_abs, tag = 'smem constant byte address 0x4 - core index']
  #allocation1 [shape = 'u32[144,128]{1,0:T(1,128)}', space=vmem, size = 0x12000, scoped, tag = 'internal scratch']
  #allocation2 [shape = 's32[1]{0}', space=sflag, size = 0x4, scoped, tag = 'scoped memory for tpu_custom_call.1']
  #allocation3 [shape = 's32[1]{0:T(128)S(6)}', space=smem, size = 0x200, scoped, tag = 'prefetched SMEM operand 0']
  %s0 = inlined_call_operand.<no memory space> [shape: s32[1], index: 0, kind: input, shape index: {}]
  %s1 = inlined_call_operand.hbm [shape: f32[8,128], index: 1, kind: input, shape index: {}]
  %s2 = inlined_call_operand.hbm [shape: f32[8,128], index: 2, kind: input, shape index: {}]
  %s3 = inlined_call_operand.hbm [shape: f32[8,128], index: 3, kind: output, shape index: {}]
  %s4 = sld [smem:[#allocation0]]
  $region26: #{tpu_custom_call.1} parent=0
    _
  %s6 = ssub.s32 1, %s4
  %s7 = scalar_select 0, %s6, %s4
  %8 = sst [smem:[#allocation3]] %s0
  $region1: #{tpu_custom_call.1} parent=0
    #allocation4 [shape = 'u8[4096]{0}', space=vmem, size = 0x1000, scoped, tag = 'input window, operand 1, single buffered']
    #allocation5 [shape = 's32[1]{0}', space=sflag, size = 0x4, scoped, tag = 'scoped memory for tpu_custom_call.1']
    #allocation6 [shape = 's32[1]{0}', space=sflag, size = 0x4, scoped, tag = 'scoped memory for tpu_custom_call.1']
    #allocation7 [shape = 'u8[4096]{0}', space=vmem, size = 0x1000, scoped, tag = 'input window, operand 2, single buffered']
    #allocation8 [shape = 's32[1]{0}', space=sflag, size = 0x4, scoped, tag = 'scoped memory for tpu_custom_call.1']
    #allocation9 [shape = 'u8[4096]{0}', space=vmem, size = 0x1000, scoped, tag = 'output window, operand 0, single buffered']
    %9 = vsyncpa [#allocation5], 0
    %10 = vsyncpa [#allocation8], 0
    %11 = vsyncpa [#allocation6], 0
    // Predicated region
    $region2: #{tpu_custom_call.1} parent=1 // pred_check
      _
    $region3: #{tpu_custom_call.1} parent=1 // pred_check_branch
      %13 = sbr.rel (0) target = $region5
    $region4: #{tpu_custom_call.1} parent=1 // pred_region
      %s15 = ssub.s32 128, 128
      %16 = vsyncadd [#allocation5], %s15
      %s18 = sshll.u32 [#allocation4], 4
      %s19 = int_to_ptr.vmem [resolvable:$true] %s18
      %21 = dma.hbm_to_vmem [thread:$0]  %s1, 128, %s19, [#allocation5]
    $region5: #{tpu_custom_call.1} parent=1 // pred_fallthru
      _
    // Predicated region
    $region6: #{tpu_custom_call.1} parent=1 // pred_check
      _
    $region7: #{tpu_custom_call.1} parent=1 // pred_check_branch
      %23 = sbr.rel (0) target = $region9
    $region8: #{tpu_custom_call.1} parent=1 // pred_region
      %s25 = ssub.s32 128, 128
      %26 = vsyncadd [#allocation8], %s25
      %s28 = sshll.u32 [#allocation7], 4
      %s29 = int_to_ptr.vmem [resolvable:$true] %s28
      %31 = dma.hbm_to_vmem [thread:$0]  %s2, 128, %s29, [#allocation8]
    $region9: #{tpu_custom_call.1} parent=1 // pred_fallthru
      _
    // Predicated region
    $region10: #{tpu_custom_call.1} parent=1 // pred_check
      _
    $region11: #{tpu_custom_call.1} parent=1 // pred_check_branch
      %33 = sbr.rel (0) target = $region13
    $region12: #{tpu_custom_call.1} parent=1 // pred_region
      %34 = dma.done [#allocation5], 128
    $region13: #{tpu_custom_call.1} parent=1 // pred_fallthru
      _
    // Predicated region
    $region14: #{tpu_custom_call.1} parent=1 // pred_check
      _
    $region15: #{tpu_custom_call.1} parent=1 // pred_check_branch
      %36 = sbr.rel (0) target = $region17
    $region16: #{tpu_custom_call.1} parent=1 // pred_region
      %37 = dma.done [#allocation8], 128
    $region17: #{tpu_custom_call.1} parent=1 // pred_fallthru
      _
    %v38 = vld [vmem:[#allocation4] sm:$0xff]
    %v39 = vld [vmem:[#allocation7] sm:$0xff]
    %v40 = vadd.f32 %v38, %v39
    %41 = vst [vmem:[#allocation9] sm:$0xff] %v40
    // Predicated region
    $region18: #{tpu_custom_call.1} parent=1 // pred_check
      _
    $region19: #{tpu_custom_call.1} parent=1 // pred_check_branch
      %43 = sbr.rel (0) target = $region21
    $region20: #{tpu_custom_call.1} parent=1 // pred_region
      %s45 = ssub.s32 128, 128
      %46 = vsyncadd [#allocation6], %s45
      %s48 = sshll.u32 [#allocation9], 4
      %s49 = int_to_ptr.vmem [resolvable:$true] %s48
      %51 = dma.vmem_to_hbm [thread:$0]  %s49, 128, %s3, [#allocation6]
    $region21: #{tpu_custom_call.1} parent=1 // pred_fallthru
      _
    // Predicated region
    $region22: #{tpu_custom_call.1} parent=1 // pred_check
      _
    $region23: #{tpu_custom_call.1} parent=1 // pred_check_branch
      %53 = sbr.rel (0) target = $region25
    $region24: #{tpu_custom_call.1} parent=1 // pred_region
      %54 = dma.done [#allocation6], 128
    $region25: #{tpu_custom_call.1} parent=1 // pred_fallthru
      _
    %55 = vsyncpa [#allocation5], 1
    %56 = vsyncpa [#allocation8], 1
    %57 = vsyncpa [#allocation6], 1

</llo_original>
